<compile_context>
chip_gen: v6e
topology: v6e:2x2x1
jax: 0.10.0
libtpu: 0.0.40
codegen_flags: <defaults>
</compile_context>

<pallas_src>
import math

import jax
import jax.numpy as jnp
from jax.experimental import pallas as pl
from jax.experimental.pallas import tpu as pltpu

EMBEDDING_DIM = 64
H_DIM = 64
BOTTLENECK_DIM = 64

# ---------------------------------------------------------------------------
# Raw (torch-layout) parameters.
# ---------------------------------------------------------------------------
PARAM_ORDER = [
    "w_se", "b_se",
    "w_s1", "b_s1", "w_s2", "b_s2",
    "w_m1a", "b_m1a", "w_m1b", "b_m1b",
    "w_m2a", "b_m2a", "w_m2b", "b_m2b",
    "w_e1", "b_e1", "w_e2", "b_e2",
]

PARAM_SHAPES = {
    "w_se": (2, EMBEDDING_DIM), "b_se": (1, EMBEDDING_DIM),
    "w_s1": (2 * H_DIM + EMBEDDING_DIM, 128), "b_s1": (1, 128),
    "w_s2": (128, H_DIM), "b_s2": (1, H_DIM),
    "w_m1a": (H_DIM, 128), "b_m1a": (1, 128),
    "w_m1b": (128, H_DIM), "b_m1b": (1, H_DIM),
    "w_m2a": (2 * H_DIM, 128), "b_m2a": (1, 128),
    "w_m2b": (128, H_DIM), "b_m2b": (1, H_DIM),
    "w_e1": (H_DIM, 128), "b_e1": (1, 128),
    "w_e2": (128, BOTTLENECK_DIM), "b_e2": (1, BOTTLENECK_DIM),
}

# ---------------------------------------------------------------------------
# Precomposed ("collapsed") parameters used by the kernel.
# ---------------------------------------------------------------------------
COMP_ORDER = ["w_hA", "w_pA", "c_A", "w_BC", "b_BC", "c_C",
              "w_e1", "b_e1", "w_e2", "b_e2"]
COMP_SHAPES = {
    "w_hA": (H_DIM, 2 * H_DIM),   # [W_s_recv | W_s_send], W_s = w_s1 @ w_s2
    "w_pA": (2, 2 * H_DIM),       # [-w_se@W_s_rel | +w_se@W_s_rel]
    "c_A": (1, H_DIM),            # b_se@W_s_rel + b_s1@w_s2 + b_s2
    "w_BC": (H_DIM, 2 * H_DIM),   # (w_m1a@w_m1b) @ [W_m2_recv|W_m2_send] / F
    "b_BC": (1, 2 * H_DIM),       # (b_m1a@w_m1b + b_m1b) @ [W_m2_recv|W_m2_send]
    "c_C": (1, H_DIM),            # b_m2a@w_m2b + b_m2b
    "w_e1": (H_DIM, 128),         # w_e1 / F   (2nd edge2node scale folded)
    "b_e1": (1, 128),
    "w_e2": (128, BOTTLENECK_DIM),
    "b_e2": (1, BOTTLENECK_DIM),
}

_PACK_WIDTH = 128


def _round_up(x, m):
    return ((x + m - 1) // m) * m


_OFFSETS = {}
_rows = 0
for _name in COMP_ORDER:
    _OFFSETS[_name] = _rows
    _rows += _round_up(COMP_SHAPES[_name][0], 8)
_PACK_ROWS = _round_up(_rows, 8)


def _compose(params):
    """Precompose the activation-free linear chains (exact up to reassociation)."""
    hp = jax.lax.Precision.HIGHEST

    def dot(a, b):
        return jnp.dot(a, b, precision=hp)

    p = {k: jnp.asarray(v, jnp.float32) for k, v in params.items()}
    hd = H_DIM
    inv_f = 1.0 / float(hd)   # edge2node divides by the feature dim (= 64)

    # --- nmp_mlp_start: Linear(192,128) -> Drop -> Linear(128,64) -> Drop
    w_s = dot(p["w_s1"], p["w_s2"])                           # (192, 64)
    w_s_recv, w_s_send, w_s_rel = w_s[:hd], w_s[hd:2 * hd], w_s[2 * hd:]
    w_p = dot(p["w_se"], w_s_rel)                             # (2, 64)

    comp = {
        "w_hA": jnp.concatenate([w_s_recv, w_s_send], axis=1),
        "w_pA": jnp.concatenate([-w_p, w_p], axis=1),
        "c_A": dot(p["b_se"], w_s_rel) + dot(p["b_s1"], p["w_s2"]) + p["b_s2"],
    }

    # --- mlp1 (64->128->64) and mlp2 (128->128->64), both activation-free,
    #     fused across the intermediate node2edge/edge2node.
    w_m1 = dot(p["w_m1a"], p["w_m1b"])                        # (64, 64)
    b_m1 = dot(p["b_m1a"], p["w_m1b"]) + p["b_m1b"]           # (1, 64)
    w_m2 = dot(p["w_m2a"], p["w_m2b"])                        # (128, 64)
    w_m2_rs = jnp.concatenate([w_m2[:hd], w_m2[hd:]], axis=1)  # (64, 128)
    comp["w_BC"] = dot(w_m1, w_m2_rs) * inv_f                 # fold 1st edge2node /F
    comp["b_BC"] = dot(b_m1, w_m2_rs)
    comp["c_C"] = dot(p["b_m2a"], p["w_m2b"]) + p["b_m2b"]

    # --- nmp_mlp_end keeps its ReLUs; fold the 2nd edge2node /F into w_e1.
    comp["w_e1"] = p["w_e1"] * inv_f
    comp["b_e1"] = p["b_e1"]
    comp["w_e2"] = p["w_e2"]
    comp["b_e2"] = p["b_e2"]
    return comp


def pack_params(params, dtype=jnp.float32):
    comp = _compose(params)
    buf = jnp.zeros((_PACK_ROWS, _PACK_WIDTH), jnp.float32)
    for name in COMP_ORDER:
        r, c = COMP_SHAPES[name]
        buf = buf.at[_OFFSETS[name]:_OFFSETS[name] + r, :c].set(
            comp[name].reshape(r, c))
    return buf.astype(dtype)


# ---------------------------------------------------------------------------
# Kernel body (one batch tile of TB graphs, N nodes each).
# ---------------------------------------------------------------------------
def _kernel(h_ref, pos_ref, w_ref, out_ref):
    tb, n, hd = h_ref.shape
    nf = float(n)

    def w(name):
        rows, cols = COMP_SHAPES[name]
        off = _OFFSETS[name]
        return w_ref[off:off + rows, :cols]

    def mm(a, b):
        if a.dtype != b.dtype:
            a = a.astype(b.dtype)
        return jnp.dot(a, b, preferred_element_type=jnp.float32)

    h = h_ref[...].reshape(tb * n, hd)            # (M, 64)  f32
    pos = pos_ref[...].reshape(tb * n, 2)         # (M, 2)   f32

    # --- stage A (node granularity): f = [f_recv | f_send]   (M, 128)
    #     ef(i,j) = f_recv[j] + f_send[i] + c_A
    w_pa = w("w_pA")
    f = (mm(h, w("w_hA"))
         + pos[:, 0:1] * w_pa[0:1, :]
         + pos[:, 1:2] * w_pa[1:2, :])
    f3 = f.reshape(tb, n, 2 * H_DIM)
    send_sum = jnp.sum(f3[:, :, H_DIM:], axis=1, keepdims=True)      # (tb,1,64)
    # unscaled edge2node: sum_i ef(i,j) = n*f_recv[j] + sum_i f_send[i] + n*c_A
    inc1_u = f3[:, :, :H_DIM] * nf + (send_sum + w("c_A") * nf)      # (tb,n,64)

    # --- stages B+C fused: mlp1, node2edge, mlp2, edge2node (all linear)
    g = mm(inc1_u.reshape(tb * n, H_DIM), w("w_BC")) + w("b_BC")     # (M,128)
    g3 = g.reshape(tb, n, 2 * H_DIM)
    gsend_sum = jnp.sum(g3[:, :, H_DIM:], axis=1, keepdims=True)
    inc2_u = g3[:, :, :H_DIM] * nf + (gsend_sum + w("c_C") * nf)     # (tb,n,64)

    # --- nmp_mlp_end: Linear -> ReLU -> (Dropout=id) -> Linear -> ReLU
    x = jnp.maximum(mm(inc2_u.reshape(tb * n, H_DIM), w("w_e1")) + w("b_e1"), 0.0)
    out = jnp.maximum(mm(x, w("w_e2")) + w("b_e2"), 0.0)             # (M, 64)

    out_ref[...] = out.reshape(tb, n, BOTTLENECK_DIM).astype(out_ref.dtype)


# ---------------------------------------------------------------------------
# Tile-size / VMEM heuristics (generation-aware).
# ---------------------------------------------------------------------------
def _tpu_vmem_bytes():
    try:
        info = pltpu.get_tpu_info()
        v = getattr(info, "vmem_capacity_bytes", None)
        if v is not None and int(v) > 0:
            return int(v)
    except Exception:
        pass
    return 64 << 20   # conservative fallback: v7x per-TensorCore VMEM


def _per_graph_vmem_bytes(n):
    n8 = _round_up(max(int(n), 1), 8)
    lane_slab = n8 * 128 * 4            # one (n, <=128-lane) f32 slab, lane padded
    io = 3 * 2 * lane_slab              # h / pos / out tiles, double-buffered
    live = 10 * lane_slab               # conservative live-intermediate count
    return io + live


def _choose_tb(batch, n, budget_bytes):
    per_graph = _per_graph_vmem_bytes(n)
    cap = max(1, budget_bytes // per_graph)
    fitting = [d for d in range(1, batch + 1) if batch % d == 0 and d <= cap]
    if not fitting:
        return 1
    if batch >= 2:
        # Keep >= 2 grid steps so both v7x TensorCores get work under the
        # "parallel" grid axis (negligible cost on v5e/v6e: ~0.35us/step).
        two_step = [d for d in fitting if batch // d >= 2]
        if two_step:
            return max(two_step)
    return max(fitting)


def _vmem_limit_bytes(tb, n, vmem_total):
    w_bytes = 2 * _PACK_ROWS * _PACK_WIDTH * 4
    est = w_bytes + tb * _per_graph_vmem_bytes(n) + (8 << 20)
    hi = max(32 << 20, int(vmem_total * 0.9))
    return int(min(max(est, 32 << 20), hi))


# ---------------------------------------------------------------------------
# Public wrapper.
# ---------------------------------------------------------------------------
def nmp_net_batch(h_states, end_pos, params, *, use_bf16=False):
    """Forward pass of NmpNet_batch (eval mode). use_bf16 packs the weights in
    bf16 for the MXU fast path (validate at ~1e-2, not 1e-4)."""
    B, N, H = h_states.shape
    assert H == H_DIM
    w_dtype = jnp.bfloat16 if use_bf16 else jnp.float32
    wbuf = pack_params(params, dtype=w_dtype)

    vmem_total = _tpu_vmem_bytes()
    tb = _choose_tb(B, N, budget_bytes=int(vmem_total * 0.6))

    fn = pl.pallas_call(
        _kernel,
        out_shape=jax.ShapeDtypeStruct((B, N, BOTTLENECK_DIM), jnp.float32),
        grid_spec=pltpu.PrefetchScalarGridSpec(
            num_scalar_prefetch=0,
            grid=(B // tb,),
            in_specs=[
                pl.BlockSpec((tb, N, H_DIM), lambda b: (b, 0, 0)),
                pl.BlockSpec((tb, N, 2), lambda b: (b, 0, 0)),
                pl.BlockSpec((_PACK_ROWS, _PACK_WIDTH), lambda b: (0, 0)),
            ],
            out_specs=pl.BlockSpec((tb, N, BOTTLENECK_DIM), lambda b: (b, 0, 0)),
        ),
        compiler_params=pltpu.CompilerParams(
            dimension_semantics=("parallel",),
            vmem_limit_bytes=_vmem_limit_bytes(tb, N, vmem_total)),
    )
    return fn(jnp.asarray(h_states, jnp.float32),
              jnp.asarray(end_pos, jnp.float32),
              wbuf)


# ---------------------------------------------------------------------------
# Pure-JAX reference (mirrors the torch forward in eval mode) and test driver.
# ---------------------------------------------------------------------------
def _adjacency(n):
    rows = jnp.repeat(jnp.arange(n), n)   # sender index  i = e // n
    cols = jnp.tile(jnp.arange(n), n)     # receiver index j = e %  n
    rel_rec = jax.nn.one_hot(cols, n, dtype=jnp.float32)    # (n*n, n)
    rel_send = jax.nn.one_hot(rows, n, dtype=jnp.float32)   # (n*n, n)
    return rel_rec, rel_send


def init_params(key):
    params = {}
    keys = jax.random.split(key, len(PARAM_ORDER))
    for k, name in zip(keys, PARAM_ORDER):
        shape = PARAM_SHAPES[name]
        fan_in = shape[0] if name.startswith("w") else shape[1]
        scale = 1.0 / math.sqrt(fan_in)
        params[name] = jax.random.uniform(
            k, shape, jnp.float32, minval=-scale, maxval=scale)
    return params


def reference(h_states, end_pos, params):
    """Pure-JAX mirror of the torch forward (eval mode, un-composed weights)."""
    B, N, _ = h_states.shape
    rel_pos = (end_pos[:, :, None, :] - end_pos[:, None, :, :]).reshape(B, N * N, 2)
    rel_emb = rel_pos @ params["w_se"] + params["b_se"]
    rr, rs = _adjacency(N)
    rr = jnp.broadcast_to(rr, (B,) + rr.shape)
    rs = jnp.broadcast_to(rs, (B,) + rs.shape)

    def node2edge(x):
        return jnp.concatenate([rr @ x, rs @ x], axis=-1)

    def edge2node(x):
        inc = jnp.swapaxes(rr, 1, 2) @ x
        return inc / inc.shape[-1]

    ef = jnp.concatenate([node2edge(h_states), rel_emb], axis=-1)
    ef = (ef @ params["w_s1"] + params["b_s1"]) @ params["w_s2"] + params["b_s2"]
    nf = edge2node(ef)
    nf = (nf @ params["w_m1a"] + params["b_m1a"]) @ params["w_m1b"] + params["b_m1b"]
    ef = node2edge(nf)
    ef = (ef @ params["w_m2a"] + params["b_m2a"]) @ params["w_m2b"] + params["b_m2b"]
    nf = edge2node(ef)
    x = jax.nn.relu(nf @ params["w_e1"] + params["b_e1"])
    return jax.nn.relu(x @ params["w_e2"] + params["b_e2"])


if __name__ == "__main__":
    key = jax.random.PRNGKey(0)
    k_p, k_h, k_e = jax.random.split(key, 3)

    B, N = 2, 8            # batch of 2 scenes, 8 agents each
    params = init_params(k_p)
    h_states = jax.random.normal(k_h, (B, N, H_DIM), dtype=jnp.float32)
    end_pos = jax.random.normal(k_e, (B, N, 2), dtype=jnp.float32)

    out = jax.block_until_ready(nmp_net_batch(h_states, end_pos, params))
    ref = jax.block_until_ready(reference(h_states, end_pos, params))

    assert out.shape == (B, N, BOTTLENECK_DIM)
    err = float(jnp.max(jnp.abs(out - ref)))
    assert jnp.allclose(out, ref, rtol=1e-4, atol=1e-4), f"max abs err {err}"
    print("KERNEL_OK")
</pallas_src>

<mosaic_0001>
module attributes {stable_mosaic.version = 11 : i64} {
  func.func @_kernel(%arg0: i32, %arg1: memref<1x8x64xf32, #tpu.memory_space<vmem>>, %arg2: memref<1x8x2xf32, #tpu.memory_space<vmem>>, %arg3: memref<368x128xf32, #tpu.memory_space<vmem>>, %arg4: memref<1x8x64xf32, #tpu.memory_space<vmem>>) attributes {dimension_semantics = [#tpu.dimension_semantics<parallel>], iteration_bounds = array<i64: 2>, scalar_prefetch = 0 : i64, scratch_operands = 0 : i64, tpu.core_type = #tpu.core_type<tc>, window_params = [{transform_indices = @transform_0, window_bounds = array<i64: 1, 8, 64>}, {transform_indices = @transform_1, window_bounds = array<i64: 1, 8, 2>}, {pipeline_mode = #tpu.pipeline_mode<synchronous>, transform_indices = @transform_2, window_bounds = array<i64: 368, 128>}, {transform_indices = @transform_3, window_bounds = array<i64: 1, 8, 64>}]} {
    %c0 = arith.constant 0 : index
    %c0_0 = arith.constant 0 : index
    %c0_1 = arith.constant 0 : index
    %0 = vector.load %arg1[%c0, %c0_0, %c0_1] : memref<1x8x64xf32, #tpu.memory_space<vmem>>, vector<1x8x64xf32>
    %1 = vector.shape_cast %0 : vector<1x8x64xf32> to vector<8x64xf32>
    %c0_2 = arith.constant 0 : index
    %c0_3 = arith.constant 0 : index
    %c0_4 = arith.constant 0 : index
    %2 = vector.load %arg2[%c0_2, %c0_3, %c0_4] : memref<1x8x2xf32, #tpu.memory_space<vmem>>, vector<1x8x2xf32>
    %3 = vector.shape_cast %2 : vector<1x8x2xf32> to vector<8x2xf32>
    %c64 = arith.constant 64 : index
    %c0_5 = arith.constant 0 : index
    %4 = vector.load %arg3[%c64, %c0_5] : memref<368x128xf32, #tpu.memory_space<vmem>>, vector<2x128xf32>
    %c0_6 = arith.constant 0 : index
    %c0_7 = arith.constant 0 : index
    %5 = vector.load %arg3[%c0_6, %c0_7] : memref<368x128xf32, #tpu.memory_space<vmem>>, vector<64x128xf32>
    %cst = arith.constant dense<0.000000e+00> : vector<8x128xf32>
    %6 = tpu.matmul %1, %5, %cst {dimension_numbers = #tpu.dot_dimension_numbers<[1], [0], [0], [1], [0, 0, 1, 1], [], []>} : vector<8x64xf32>, vector<64x128xf32>, vector<8x128xf32> -> vector<8x128xf32>
    %7 = vector.extract_strided_slice %3 {offsets = [0, 0], sizes = [8, 1], strides = [1, 1]} : vector<8x2xf32> to vector<8x1xf32>
    %8 = vector.extract_strided_slice %4 {offsets = [0, 0], sizes = [1, 128], strides = [1, 1]} : vector<2x128xf32> to vector<1x128xf32>
    %9 = vector.broadcast %7 : vector<8x1xf32> to vector<8x128xf32>
    %10 = vector.broadcast %8 : vector<1x128xf32> to vector<8x128xf32>
    %11 = arith.mulf %9, %10 : vector<8x128xf32>
    %12 = arith.addf %6, %11 : vector<8x128xf32>
    %13 = vector.extract_strided_slice %3 {offsets = [0, 1], sizes = [8, 1], strides = [1, 1]} : vector<8x2xf32> to vector<8x1xf32>
    %14 = vector.extract_strided_slice %4 {offsets = [1, 0], sizes = [1, 128], strides = [1, 1]} : vector<2x128xf32> to vector<1x128xf32>
    %15 = vector.broadcast %13 : vector<8x1xf32> to vector<8x128xf32>
    %16 = vector.broadcast %14 : vector<1x128xf32> to vector<8x128xf32>
    %17 = arith.mulf %15, %16 : vector<8x128xf32>
    %18 = arith.addf %12, %17 : vector<8x128xf32>
    %19 = vector.shape_cast %18 : vector<8x128xf32> to vector<1x8x128xf32>
    %20 = vector.extract_strided_slice %19 {offsets = [0, 0, 64], sizes = [1, 8, 64], strides = [1, 1, 1]} : vector<1x8x128xf32> to vector<1x8x64xf32>
    %cst_8 = arith.constant dense<0.000000e+00> : vector<1x64xf32>
    %21 = vector.multi_reduction <add>, %20, %cst_8 [1] : vector<1x8x64xf32> to vector<1x64xf32>
    %22 = vector.shape_cast %21 : vector<1x64xf32> to vector<1x1x64xf32>
    %23 = vector.extract_strided_slice %19 {offsets = [0, 0, 0], sizes = [1, 8, 64], strides = [1, 1, 1]} : vector<1x8x128xf32> to vector<1x8x64xf32>
    %cst_9 = arith.constant 8.000000e+00 : f32
    %24 = vector.broadcast %cst_9 : f32 to vector<1x8x64xf32>
    %25 = arith.mulf %23, %24 : vector<1x8x64xf32>
    %c72 = arith.constant 72 : index
    %c0_10 = arith.constant 0 : index
    %26 = vector.load %arg3[%c72, %c0_10] : memref<368x128xf32, #tpu.memory_space<vmem>>, vector<1x64xf32>
    %cst_11 = arith.constant 8.000000e+00 : f32
    %27 = vector.broadcast %cst_11 : f32 to vector<1x64xf32>
    %28 = arith.mulf %26, %27 : vector<1x64xf32>
    %29 = vector.shape_cast %28 : vector<1x64xf32> to vector<1x1x64xf32>
    %30 = arith.addf %22, %29 : vector<1x1x64xf32>
    %31 = vector.broadcast %30 : vector<1x1x64xf32> to vector<1x8x64xf32>
    %32 = arith.addf %25, %31 : vector<1x8x64xf32>
    %33 = vector.shape_cast %32 : vector<1x8x64xf32> to vector<8x64xf32>
    %c80 = arith.constant 80 : index
    %c0_12 = arith.constant 0 : index
    %34 = vector.load %arg3[%c80, %c0_12] : memref<368x128xf32, #tpu.memory_space<vmem>>, vector<64x128xf32>
    %cst_13 = arith.constant dense<0.000000e+00> : vector<8x128xf32>
    %35 = tpu.matmul %33, %34, %cst_13 {dimension_numbers = #tpu.dot_dimension_numbers<[1], [0], [0], [1], [0, 0, 1, 1], [], []>} : vector<8x64xf32>, vector<64x128xf32>, vector<8x128xf32> -> vector<8x128xf32>
    %c144 = arith.constant 144 : index
    %c0_14 = arith.constant 0 : index
    %36 = vector.load %arg3[%c144, %c0_14] : memref<368x128xf32, #tpu.memory_space<vmem>>, vector<1x128xf32>
    %37 = vector.broadcast %36 : vector<1x128xf32> to vector<8x128xf32>
    %38 = arith.addf %35, %37 : vector<8x128xf32>
    %39 = vector.shape_cast %38 : vector<8x128xf32> to vector<1x8x128xf32>
    %40 = vector.extract_strided_slice %39 {offsets = [0, 0, 64], sizes = [1, 8, 64], strides = [1, 1, 1]} : vector<1x8x128xf32> to vector<1x8x64xf32>
    %cst_15 = arith.constant dense<0.000000e+00> : vector<1x64xf32>
    %41 = vector.multi_reduction <add>, %40, %cst_15 [1] : vector<1x8x64xf32> to vector<1x64xf32>
    %42 = vector.shape_cast %41 : vector<1x64xf32> to vector<1x1x64xf32>
    %43 = vector.extract_strided_slice %39 {offsets = [0, 0, 0], sizes = [1, 8, 64], strides = [1, 1, 1]} : vector<1x8x128xf32> to vector<1x8x64xf32>
    %cst_16 = arith.constant 8.000000e+00 : f32
    %44 = vector.broadcast %cst_16 : f32 to vector<1x8x64xf32>
    %45 = arith.mulf %43, %44 : vector<1x8x64xf32>
    %c152 = arith.constant 152 : index
    %c0_17 = arith.constant 0 : index
    %46 = vector.load %arg3[%c152, %c0_17] : memref<368x128xf32, #tpu.memory_space<vmem>>, vector<1x64xf32>
    %cst_18 = arith.constant 8.000000e+00 : f32
    %47 = vector.broadcast %cst_18 : f32 to vector<1x64xf32>
    %48 = arith.mulf %46, %47 : vector<1x64xf32>
    %49 = vector.shape_cast %48 : vector<1x64xf32> to vector<1x1x64xf32>
    %50 = arith.addf %42, %49 : vector<1x1x64xf32>
    %51 = vector.broadcast %50 : vector<1x1x64xf32> to vector<1x8x64xf32>
    %52 = arith.addf %45, %51 : vector<1x8x64xf32>
    %53 = vector.shape_cast %52 : vector<1x8x64xf32> to vector<8x64xf32>
    %c160 = arith.constant 160 : index
    %c0_19 = arith.constant 0 : index
    %54 = vector.load %arg3[%c160, %c0_19] : memref<368x128xf32, #tpu.memory_space<vmem>>, vector<64x128xf32>
    %cst_20 = arith.constant dense<0.000000e+00> : vector<8x128xf32>
    %55 = tpu.matmul %53, %54, %cst_20 {dimension_numbers = #tpu.dot_dimension_numbers<[1], [0], [0], [1], [0, 0, 1, 1], [], []>} : vector<8x64xf32>, vector<64x128xf32>, vector<8x128xf32> -> vector<8x128xf32>
    %c224 = arith.constant 224 : index
    %c0_21 = arith.constant 0 : index
    %56 = vector.load %arg3[%c224, %c0_21] : memref<368x128xf32, #tpu.memory_space<vmem>>, vector<1x128xf32>
    %57 = vector.broadcast %56 : vector<1x128xf32> to vector<8x128xf32>
    %58 = arith.addf %55, %57 : vector<8x128xf32>
    %cst_22 = arith.constant 0.000000e+00 : f32
    %59 = vector.broadcast %cst_22 : f32 to vector<8x128xf32>
    %60 = arith.maximumf %58, %59 : vector<8x128xf32>
    %c232 = arith.constant 232 : index
    %c0_23 = arith.constant 0 : index
    %61 = vector.load %arg3[%c232, %c0_23] : memref<368x128xf32, #tpu.memory_space<vmem>>, vector<128x64xf32>
    %cst_24 = arith.constant dense<0.000000e+00> : vector<8x64xf32>
    %62 = tpu.matmul %60, %61, %cst_24 {dimension_numbers = #tpu.dot_dimension_numbers<[1], [0], [0], [1], [0, 0, 1, 1], [], []>} : vector<8x128xf32>, vector<128x64xf32>, vector<8x64xf32> -> vector<8x64xf32>
    %c360 = arith.constant 360 : index
    %c0_25 = arith.constant 0 : index
    %63 = vector.load %arg3[%c360, %c0_25] : memref<368x128xf32, #tpu.memory_space<vmem>>, vector<1x64xf32>
    %64 = vector.broadcast %63 : vector<1x64xf32> to vector<8x64xf32>
    %65 = arith.addf %62, %64 : vector<8x64xf32>
    %cst_26 = arith.constant 0.000000e+00 : f32
    %66 = vector.broadcast %cst_26 : f32 to vector<8x64xf32>
    %67 = arith.maximumf %65, %66 : vector<8x64xf32>
    %68 = vector.shape_cast %67 : vector<8x64xf32> to vector<1x8x64xf32>
    %c0_27 = arith.constant 0 : index
    %c0_28 = arith.constant 0 : index
    %c0_29 = arith.constant 0 : index
    %69 = vector.load %arg4[%c0_27, %c0_28, %c0_29] : memref<1x8x64xf32, #tpu.memory_space<vmem>>, vector<1x8x64xf32>
    tpu.vector_store %arg4[%c0_27, %c0_28, %c0_29], %68 {strides = array<i32>} : memref<1x8x64xf32, #tpu.memory_space<vmem>>, vector<1x8x64xf32>,
    return
  }
  func.func @transform_0(%arg0: i32) -> (i32, i32, i32) {
    %c0_i32 = arith.constant 0 : i32
    %c0_i32_0 = arith.constant 0 : i32
    %c0_i32_1 = arith.constant 0 : i32
    return %arg0, %c0_i32, %c0_i32_0 : i32, i32, i32
  }
  func.func @transform_1(%arg0: i32) -> (i32, i32, i32) {
    %c0_i32 = arith.constant 0 : i32
    %c0_i32_0 = arith.constant 0 : i32
    %c0_i32_1 = arith.constant 0 : i32
    return %arg0, %c0_i32, %c0_i32_0 : i32, i32, i32
  }
  func.func @transform_2(%arg0: i32) -> (i32, i32) {
    %c0_i32 = arith.constant 0 : i32
    %c0_i32_0 = arith.constant 0 : i32
    %c0_i32_1 = arith.constant 0 : i32
    return %c0_i32, %c0_i32_0 : i32, i32
  }
  func.func @transform_3(%arg0: i32) -> (i32, i32, i32) {
    %c0_i32 = arith.constant 0 : i32
    %c0_i32_0 = arith.constant 0 : i32
    %c0_i32_1 = arith.constant 0 : i32
    return %arg0, %c0_i32, %c0_i32_0 : i32, i32, i32
  }
}

</mosaic_0001>

<llo_original>
// kernel: tpu_custom_call.1
$region0: #{tpu_custom_call.1}
  #allocation0 [shape = 'u32[]', space=smem, size = 0x4, offset = 0x4, fixed_abs, tag = 'smem constant byte address 0x4 - core index']
  #allocation1 [shape = 'u32[144,128]{1,0:T(1,128)}', space=vmem, size = 0x12000, scoped, tag = 'internal scratch']
  %s0 = inlined_call_operand.vmem [shape: f32[2,8,64], index: 0, kind: input, shape index: {}]
  %s1 = inlined_call_operand.vmem [shape: f32[2,8,2], index: 1, kind: input, shape index: {}]
  %s2 = inlined_call_operand.hbm [shape: f32[368,128], index: 2, kind: input, shape index: {}]
  %s3 = inlined_call_operand.hbm [shape: f32[2,8,64], index: 3, kind: output, shape index: {}]
  %s4 = sld [smem:[#allocation0]]
  $region49: #{tpu_custom_call.1} parent=0
    _
  %s6 = ssub.s32 1, %s4
  %s7 = scalar_select 0, %s6, %s4
  $region1: #{tpu_custom_call.1} parent=0
    #allocation2 [shape = 'u8[188416]{0}', space=vmem, size = 0x2e000, scoped, tag = 'input window, operand 2, single buffered']
    #allocation3 [shape = 's32[2]{0}', space=sflag, size = 0x8, scoped, tag = 'scoped memory for tpu_custom_call.1']
    #allocation4 [shape = 's32[2]{0}', space=sflag, size = 0x8, scoped, tag = 'scoped memory for tpu_custom_call.1']
    #allocation5 [shape = 'u8[8192]{0}', space=vmem, size = 0x2000, scoped, tag = 'output window, operand 0']
    %8 = vsyncpa [#allocation3], 0
    %9 = vsyncpa [#allocation4], 0
    %s10 = scalar_lea.sflag [#allocation4], 1
    %11 = vsyncpa %s10, 0
    loop: start=0, step=1, limit=4
    $region2: #{tpu_custom_call.1} parent=1 // loop_pre_header
      _
    $region3: #{tpu_custom_call.1} parent=1 // loop_header
      %s13 = sphi 0, %s17
      %p14 = scmp.ge.s32.totalorder %s13, 4
      %s23 = sphi 0, %s25
      %s26 = sphi 0, %s23
      %s27 = sphi 0, %s26
      %s43 = sphi 0, %s27
      %s49 = sphi 0, %s51
      %s52 = sphi 0, %s49
      %s53 = sphi 0, %s52
      %s69 = sphi 0, %s53
      %s73 = sphi 0, %s73
      %s75 = sphi 0, %s73
      %s76 = sphi 0, %s75
      %s90 = sphi 0, %s76
      %s96 = sphi 0, %s98
      %s99 = sphi 0, %s96
      %s100 = sphi 0, %s99
      %s116 = sphi 0, %s100
    $region4: #{tpu_custom_call.1} parent=1 // loop_header_branch
      %16 = sbr.rel (%p14) target = $region8
    $region5: #{tpu_custom_call.1} parent=1 // loop_body
      %s18 = ssub.s32 %s13, 1
      %s19 = ssub.s32 %s13, 2
      %s20 = sadd.s32 %s13, 1
      %s21 = ssub.s32 %s13, %s20
      %p22 = scmp.eq.s32.totalorder %s21, 0
      %s24 = sadd.s32 %s23, 1
      %s25 = scalar_select %p22, %s23, %s24
      %p28 = pneg %p22
      %p29 = scmp.eq.s32.totalorder %s13, 1
      %p30 = por %p28, %p29
      %p31 = scmp.ne.s32.totalorder %s23, %s26
      %p32 = scmp.eq.s32.totalorder %s13, 0
      %p33 = por %p31, %p32
      %p34 = scmp.ne.s32.totalorder %s23, %s26
      %p35 = scmp.eq.s32.totalorder %s18, 1
      %p36 = por %p34, %p35
      %p37 = scmp.ne.s32.totalorder %s26, %s27
      %p38 = scmp.eq.s32.totalorder %s18, 0
      %p39 = por %p37, %p38
      %p40 = scmp.ne.s32.totalorder %s26, %s27
      %p41 = scmp.eq.s32.totalorder %s19, 1
      %p42 = por %p40, %p41
      %p44 = scmp.ne.s32.totalorder %s27, %s43
      %p45 = scmp.eq.s32.totalorder %s19, 0
      %p46 = por %p44, %p45
      %s47 = ssub.s32 %s13, %s20
      %p48 = scmp.eq.s32.totalorder %s47, 0
      %s50 = sadd.s32 %s49, 1
      %s51 = scalar_select %p48, %s49, %s50
      %p54 = pneg %p48
      %p55 = scmp.eq.s32.totalorder %s13, 1
      %p56 = por %p54, %p55
      %p57 = scmp.ne.s32.totalorder %s49, %s52
      %p58 = scmp.eq.s32.totalorder %s13, 0
      %p59 = por %p57, %p58
      %p60 = scmp.ne.s32.totalorder %s49, %s52
      %p61 = scmp.eq.s32.totalorder %s18, 1
      %p62 = por %p60, %p61
      %p63 = scmp.ne.s32.totalorder %s52, %s53
      %p64 = scmp.eq.s32.totalorder %s18, 0
      %p65 = por %p63, %p64
      %p66 = scmp.ne.s32.totalorder %s52, %s53
      %p67 = scmp.eq.s32.totalorder %s19, 1
      %p68 = por %p66, %p67
      %p70 = scmp.ne.s32.totalorder %s53, %s69
      %p71 = scmp.eq.s32.totalorder %s19, 0
      %p72 = por %p70, %p71
      %s74 = sadd.s32 %s73, 1
      %p77 = scmp.eq.s32.totalorder %s13, 1
      %p78 = scmp.ne.s32.totalorder %s73, %s75
      %p79 = scmp.eq.s32.totalorder %s13, 0
      %p80 = por %p78, %p79
      %p81 = scmp.ne.s32.totalorder %s73, %s75
      %p82 = scmp.eq.s32.totalorder %s18, 1
      %p83 = por %p81, %p82
      %p84 = scmp.ne.s32.totalorder %s75, %s76
      %p85 = scmp.eq.s32.totalorder %s18, 0
      %p86 = por %p84, %p85
      %p87 = scmp.ne.s32.totalorder %s75, %s76
      %p88 = scmp.eq.s32.totalorder %s19, 1
      %p89 = por %p87, %p88
      %p91 = scmp.ne.s32.totalorder %s76, %s90
      %p92 = scmp.eq.s32.totalorder %s19, 0
      %p93 = por %p91, %p92
      %s94 = ssub.s32 %s13, %s20
      %p95 = scmp.eq.s32.totalorder %s94, 0
      %s97 = sadd.s32 %s96, 1
      %s98 = scalar_select %p95, %s96, %s97
      %p101 = pneg %p95
      %p102 = scmp.eq.s32.totalorder %s13, 1
      %p103 = por %p101, %p102
      %p104 = scmp.ne.s32.totalorder %s96, %s99
      %p105 = scmp.eq.s32.totalorder %s13, 0
      %p106 = por %p104, %p105
      %p107 = scmp.ne.s32.totalorder %s96, %s99
      %p108 = scmp.eq.s32.totalorder %s18, 1
      %p109 = por %p107, %p108
      %p110 = scmp.ne.s32.totalorder %s99, %s100
      %p111 = scmp.eq.s32.totalorder %s18, 0
      %p112 = por %p110, %p111
      %p113 = scmp.ne.s32.totalorder %s99, %s100
      %p114 = scmp.eq.s32.totalorder %s19, 1
      %p115 = por %p113, %p114
      %p117 = scmp.ne.s32.totalorder %s100, %s116
      %p118 = scmp.eq.s32.totalorder %s19, 0
      %p119 = por %p117, %p118
      %p120 = scmp.le.s32.totalorder 1, %s13
      %p121 = scmp.lt.s32.totalorder %s13, 3
      %p122 = pnand %p120, %p121
      %p123 = pneg %p122
      // Predicated region
      $region9: #{tpu_custom_call.1} parent=5 // pred_check
        _
      $region10: #{tpu_custom_call.1} parent=5 // pred_check_branch
        %125 = sbr.rel (%p122) target = $region12
      $region11: #{tpu_custom_call.1} parent=5 // pred_region
        %s126 = ssub.s32 %s13, 1
        // Predicated region
        $region13: #{tpu_custom_call.1} parent=11 // pred_check
          %p127 = pneg %p86
        $region14: #{tpu_custom_call.1} parent=11 // pred_check_branch
          %129 = sbr.rel (%p127) target = $region16
        $region15: #{tpu_custom_call.1} parent=11 // pred_region
          %s131 = ssub.s32 5888, 5888
          %132 = vsyncadd [#allocation3], %s131
          %s133 = sshll.u32 [#allocation2], 4
          %s134 = int_to_ptr.vmem [resolvable:$true] %s133
          %139 = dma.hbm_to_vmem [thread:$0]  %s2, 5888, %s134, [#allocation3], 128, 128, 8
        $region16: #{tpu_custom_call.1} parent=11 // pred_fallthru
          _
      $region12: #{tpu_custom_call.1} parent=5 // pred_fallthru
        _
      %p140 = scmp.lt.s32.totalorder %s13, 2
      // Predicated region
      $region17: #{tpu_custom_call.1} parent=5 // pred_check
        %p141 = pneg %p140
      $region18: #{tpu_custom_call.1} parent=5 // pred_check_branch
        %143 = sbr.rel (%p141) target = $region20
      $region19: #{tpu_custom_call.1} parent=5 // pred_region
        // Predicated region
        $region21: #{tpu_custom_call.1} parent=19 // pred_check
          %p144 = pneg %p33
        $region22: #{tpu_custom_call.1} parent=19 // pred_check_branch
          %146 = sbr.rel (%p144) target = $region24
        $region23: #{tpu_custom_call.1} parent=19 // pred_region
          %p147 = scmp.lt.s32.totalorder %s13, 1
          %s148 = scalar_select %p147, %s13, 1
          %s149 = smul.addr %s148, 8
          %s150 = scalar_lea.vmem %s0, %s149
        $region24: #{tpu_custom_call.1} parent=19 // pred_fallthru
          _
        // Predicated region
        $region25: #{tpu_custom_call.1} parent=19 // pred_check
          %p151 = pneg %p59
        $region26: #{tpu_custom_call.1} parent=19 // pred_check_branch
          %153 = sbr.rel (%p151) target = $region28
        $region27: #{tpu_custom_call.1} parent=19 // pred_region
          %p154 = scmp.lt.s32.totalorder %s13, 1
          %s155 = scalar_select %p154, %s13, 1
          %s156 = smul.addr %s155, 8
          %s157 = scalar_lea.vmem %s1, %s156
        $region28: #{tpu_custom_call.1} parent=19 // pred_fallthru
          _
      $region20: #{tpu_custom_call.1} parent=5 // pred_fallthru
        _
      %p158 = scmp.le.s32.totalorder 1, %s13
      %p159 = scmp.lt.s32.totalorder %s13, 3
      %p160 = pnand %p158, %p159
      %p161 = pneg %p160
      // Predicated region
      $region29: #{tpu_custom_call.1} parent=5 // pred_check
        _
      $region30: #{tpu_custom_call.1} parent=5 // pred_check_branch
        %163 = sbr.rel (%p160) target = $region32
      $region31: #{tpu_custom_call.1} parent=5 // pred_region
        %s164 = ssub.s32 %s13, 1
        // Predicated region
        $region33: #{tpu_custom_call.1} parent=31 // pred_check
          %p165 = pneg %p86
        $region34: #{tpu_custom_call.1} parent=31 // pred_check_branch
          %167 = sbr.rel (%p165) target = $region36
        $region35: #{tpu_custom_call.1} parent=31 // pred_region
          %168 = dma.done [#allocation3], 5888
        $region36: #{tpu_custom_call.1} parent=31 // pred_fallthru
          _
        %p169 = scmp.lt.s32.totalorder %s18, 1
        %s170 = scalar_select %p169, %s18, 1
        %s171 = smul.addr %s170, 8
        %s172 = scalar_lea.vmem %s0, %s171
        %p173 = pneg %p39
        %p174 = pneg %p36
        %p175 = scmp.lt.s32.totalorder %s18, 1
        %s176 = scalar_select %p175, %s18, 1
        %s177 = smul.addr %s176, 8
        %s178 = scalar_lea.vmem %s1, %s177
        %p179 = pneg %p65
        %p180 = pneg %p62
        %p181 = pneg %p86
        %p182 = pneg %p83
        %p183 = pneg %p112
        %p184 = pneg %p109
        %s185 = sand.u32 %s99, 1
        %s186 = scalar_lea.sflag [#allocation4], %s185
        %s187 = sand.u32 %s99, 1
        %s188 = smul.addr %s187, 8
        %s189 = scalar_lea.vmem [#allocation5], %s188
        %p190 = scmp.lt.s32.totalorder %s18, 1
        %s191 = scalar_select %p190, %s18, 1
        %s192 = smul.addr %s191, 8
        %s193 = scalar_lea.vmem %s0, %s192
        %p194 = scmp.lt.s32.totalorder %s18, 1
        %s195 = scalar_select %p194, %s18, 1
        %s196 = smul.addr %s195, 8
        %s197 = scalar_lea.vmem %s1, %s196
        %v198 = vld [vmem:[%s193] sm:$0xff]
        %v199 = vld [vmem:[%s197] sm:$0xff]
        %v200 = vld [vmem:[#allocation2 + $0x40] sm:$0x3]
        %v201 = vld [vmem:[#allocation2] sm:$0xff]
        %v202 = vld [vmem:[#allocation2 + $0x8] sm:$0xff]
        %v203 = vld [vmem:[#allocation2 + $0x10] sm:$0xff]
        %v204 = vld [vmem:[#allocation2 + $0x18] sm:$0xff]
        %v205 = vld [vmem:[#allocation2 + $0x20] sm:$0xff]
        %v206 = vld [vmem:[#allocation2 + $0x28] sm:$0xff]
        %v207 = vld [vmem:[#allocation2 + $0x30] sm:$0xff]
        %v208 = vld [vmem:[#allocation2 + $0x38] sm:$0xff]
        %210 = vset.pattern.permute.xlu0 0
        %211 = vperm.xlu0 %210, %v199
        %v212 = vpop.permute.xlu0 %211
        %v214 = vlaneseq
        %v215 = vshrl.u32 %v214, 7
        %v216 = vsub.s32 0, %v215
        %v217 = vrot.slane %v200, %v216
        %v218 = vmul.f32 %v212, %v217
        %vm219 = vcmask 523264
        %v221 = vsel %vm219, %v198, 0
        %223 = vmatprep.subr.mxu0 0.0
        %224 = vmatpush1.msra.mxu0 0.0
        %225 = vmatprep.subr.mxu0 0.0
        %226 = vmatpush1.msra.mxu0 0.0
        %227 = vmatprep.subr.mxu0 0.0
        %228 = vmatpush1.msra.mxu0 0.0
        %229 = vmatprep.subr.mxu0 0.0
        %230 = vmatpush1.msra.mxu0 0.0
        %231 = vmatprep.subr.mxu0 0.0
        %232 = vmatpush1.msra.mxu0 0.0
        %233 = vmatprep.subr.mxu0 0.0
        %234 = vmatpush1.msra.mxu0 0.0
        %235 = vmatprep.subr.mxu0 0.0
        %236 = vmatpush1.msra.mxu0 0.0
        %237 = vmatprep.subr.mxu0 0.0
        %238 = vmatpush1.msra.mxu0 0.0
        %239 = vmatprep.subr.mxu0 0.0
        %240 = vmatpush1.msra.mxu0 %v208
        %241 = vmatprep.subr.mxu0 0.0
        %242 = vmatpush1.msra.mxu0 %v207
        %243 = vmatprep.subr.mxu0 0.0
        %244 = vmatpush1.msra.mxu0 %v206
        %245 = vmatprep.subr.mxu0 0.0
        %246 = vmatpush1.msra.mxu0 %v205
        %247 = vmatprep.subr.mxu0 0.0
        %248 = vmatpush1.msra.mxu0 %v204
        %249 = vmatprep.subr.mxu0 0.0
        %250 = vmatpush1.msra.mxu0 %v203
        %251 = vmatprep.subr.mxu0 0.0
        %252 = vmatpush1.msra.mxu0 %v202
        %253 = vmatprep.subr.mxu0 0.0
        %254 = vmatpush1.msra.mxu0 %v201
        %255 = vmatprep.subr.mxu0 0.0
        %256 = vmatpush2.msra.mxu0 0.0
        %257 = vmatprep.subr.mxu0 0.0
        %258 = vmatpush2.msra.mxu0 0.0
        %259 = vmatprep.subr.mxu0 0.0
        %260 = vmatpush2.msra.mxu0 0.0
        %261 = vmatprep.subr.mxu0 0.0
        %262 = vmatpush2.msra.mxu0 0.0
        %263 = vmatprep.subr.mxu0 0.0
        %264 = vmatpush2.msra.mxu0 0.0
        %265 = vmatprep.subr.mxu0 0.0
        %266 = vmatpush2.msra.mxu0 0.0
        %267 = vmatprep.subr.mxu0 0.0
        %268 = vmatpush2.msra.mxu0 0.0
        %269 = vmatprep.subr.mxu0 0.0
        %270 = vmatpush2.msra.mxu0 0.0
        %271 = vmatprep.subr.mxu0 0.0
        %272 = vmatpush2.msra.mxu0 0.0
        %273 = vmatprep.subr.mxu0 0.0
        %274 = vmatpush2.msra.mxu0 0.0
        %275 = vmatprep.subr.mxu0 0.0
        %276 = vmatpush2.msra.mxu0 0.0
        %277 = vmatprep.subr.mxu0 0.0
        %278 = vmatpush2.msra.mxu0 0.0
        %279 = vmatprep.subr.mxu0 0.0
        %280 = vmatpush2.msra.mxu0 0.0
        %281 = vmatprep.subr.mxu0 0.0
        %282 = vmatpush2.msra.mxu0 0.0
        %283 = vmatprep.subr.mxu0 0.0
        %284 = vmatpush2.msra.mxu0 0.0
        %285 = vmatprep.subr.mxu0 0.0
        %286 = vmatpush2.msra.mxu0 0.0
        %287 = vmatprep.mubr.f32.mxu0 0.0
        %288 = vmatmul.mubr.f32.gmra.mxu0 %v221
        %v289 = vpop.f32.mrf.mxu0
        %v290 = vadd.f32 %v218, %v289
        %v291 = vpop.f32.mrf.mxu0
        %292 = vdwg.mxu0
        %293 = vset.pattern.permute.xlu0 1
        %294 = vperm.xlu0 %293, %v199
        %v295 = vpop.permute.xlu0 %294
        %v297 = vlaneseq
        %v298 = vshrl.u32 %v297, 7
        %v299 = vsub.s32 1, %v298
        %v300 = vrot.slane %v200, %v299
        %v301 = vmul.f32 %v295, %v300
        %v302 = vadd.f32 %v290, %v301
        %vm303 = vcmask 1048064
        %v304 = vsel %vm303, %v302, 0.0
        %v305 = vrot.slane %v304, 4
        %v306 = vadd.f32 %v304, %v305
        %v307 = vrot.slane %v306, 2
        %v308 = vadd.f32 %v306, %v307
        %v309 = vrot.slane %v308, 1
        %v310 = vadd.f32 %v308, %v309
        %v311 = vmul.f32 %v302, 8.0
        %v312 = vld [vmem:[#allocation2 + $0x48] sm:$0x1]
        %v313 = vmul.f32 %v312, 8.0
        %315 = vrot.lane.b32.xlu0 %v313, 64
        %v316 = vpop.permute.xlu0 %315
        %v318 = vadd.f32 %v310, %v316
        %v319 = vlaneseq
        %v320 = vshrl.u32 %v319, 7
        %v321 = vsub.s32 0, %v320
        %v322 = vrot.slane %v318, %v321
        %324 = vrot.lane.b32.xlu0 %v322, 64
        %v325 = vpop.permute.xlu0 %324
        %v327 = vadd.f32 %v311, %v325
        %v328 = vld [vmem:[#allocation2 + $0x50] sm:$0xff]
        %v329 = vld [vmem:[#allocation2 + $0x58] sm:$0xff]
        %v330 = vld [vmem:[#allocation2 + $0x60] sm:$0xff]
        %v331 = vld [vmem:[#allocation2 + $0x68] sm:$0xff]
        %v332 = vld [vmem:[#allocation2 + $0x70] sm:$0xff]
        %v333 = vld [vmem:[#allocation2 + $0x78] sm:$0xff]
        %v334 = vld [vmem:[#allocation2 + $0x80] sm:$0xff]
        %v335 = vld [vmem:[#allocation2 + $0x88] sm:$0xff]
        %v336 = vld [vmem:[#allocation2 + $0x90] sm:$0x1]
        %v337 = vlaneseq
        %v338 = vshrl.u32 %v337, 7
        %v339 = vsub.s32 0, %v338
        %v340 = vrot.slane %v336, %v339
        %v342 = vsel %vm219, %v327, 0
        %344 = vmatprep.subr.mxu0 0.0
        %345 = vmatpush1.msra.mxu0 0.0
        %346 = vmatprep.subr.mxu0 0.0
        %347 = vmatpush1.msra.mxu0 0.0
        %348 = vmatprep.subr.mxu0 0.0
        %349 = vmatpush1.msra.mxu0 0.0
        %350 = vmatprep.subr.mxu0 0.0
        %351 = vmatpush1.msra.mxu0 0.0
        %352 = vmatprep.subr.mxu0 0.0
        %353 = vmatpush1.msra.mxu0 0.0
        %354 = vmatprep.subr.mxu0 0.0
        %355 = vmatpush1.msra.mxu0 0.0
        %356 = vmatprep.subr.mxu0 0.0
        %357 = vmatpush1.msra.mxu0 0.0
        %358 = vmatprep.subr.mxu0 0.0
        %359 = vmatpush1.msra.mxu0 0.0
        %360 = vmatprep.subr.mxu0 0.0
        %361 = vmatpush1.msra.mxu0 %v335
        %362 = vmatprep.subr.mxu0 0.0
        %363 = vmatpush1.msra.mxu0 %v334
        %364 = vmatprep.subr.mxu0 0.0
        %365 = vmatpush1.msra.mxu0 %v333
        %366 = vmatprep.subr.mxu0 0.0
        %367 = vmatpush1.msra.mxu0 %v332
        %368 = vmatprep.subr.mxu0 0.0
        %369 = vmatpush1.msra.mxu0 %v331
        %370 = vmatprep.subr.mxu0 0.0
        %371 = vmatpush1.msra.mxu0 %v330
        %372 = vmatprep.subr.mxu0 0.0
        %373 = vmatpush1.msra.mxu0 %v329
        %374 = vmatprep.subr.mxu0 0.0
        %375 = vmatpush1.msra.mxu0 %v328
        %376 = vmatprep.subr.mxu0 0.0
        %377 = vmatpush2.msra.mxu0 0.0
        %378 = vmatprep.subr.mxu0 0.0
        %379 = vmatpush2.msra.mxu0 0.0
        %380 = vmatprep.subr.mxu0 0.0
        %381 = vmatpush2.msra.mxu0 0.0
        %382 = vmatprep.subr.mxu0 0.0
        %383 = vmatpush2.msra.mxu0 0.0
        %384 = vmatprep.subr.mxu0 0.0
        %385 = vmatpush2.msra.mxu0 0.0
        %386 = vmatprep.subr.mxu0 0.0
        %387 = vmatpush2.msra.mxu0 0.0
        %388 = vmatprep.subr.mxu0 0.0
        %389 = vmatpush2.msra.mxu0 0.0
        %390 = vmatprep.subr.mxu0 0.0
        %391 = vmatpush2.msra.mxu0 0.0
        %392 = vmatprep.subr.mxu0 0.0
        %393 = vmatpush2.msra.mxu0 0.0
        %394 = vmatprep.subr.mxu0 0.0
        %395 = vmatpush2.msra.mxu0 0.0
        %396 = vmatprep.subr.mxu0 0.0
        %397 = vmatpush2.msra.mxu0 0.0
        %398 = vmatprep.subr.mxu0 0.0
        %399 = vmatpush2.msra.mxu0 0.0
        %400 = vmatprep.subr.mxu0 0.0
        %401 = vmatpush2.msra.mxu0 0.0
        %402 = vmatprep.subr.mxu0 0.0
        %403 = vmatpush2.msra.mxu0 0.0
        %404 = vmatprep.subr.mxu0 0.0
        %405 = vmatpush2.msra.mxu0 0.0
        %406 = vmatprep.subr.mxu0 0.0
        %407 = vmatpush2.msra.mxu0 0.0
        %408 = vmatprep.mubr.f32.mxu0 0.0
        %409 = vmatmul.mubr.f32.gmra.mxu0 %v342
        %v410 = vpop.f32.mrf.mxu0
        %v411 = vadd.f32 %v340, %v410
        %v412 = vpop.f32.mrf.mxu0
        %413 = vdwg.mxu0
        %v414 = vsel %vm303, %v411, 0.0
        %v415 = vrot.slane %v414, 4
        %v416 = vadd.f32 %v414, %v415
        %v417 = vrot.slane %v416, 2
        %v418 = vadd.f32 %v416, %v417
        %v419 = vrot.slane %v418, 1
        %v420 = vadd.f32 %v418, %v419
        %v421 = vmul.f32 %v411, 8.0
        %v422 = vld [vmem:[#allocation2 + $0x98] sm:$0x1]
        %v423 = vmul.f32 %v422, 8.0
        %425 = vrot.lane.b32.xlu0 %v423, 64
        %v426 = vpop.permute.xlu0 %425
        %v428 = vadd.f32 %v420, %v426
        %v429 = vlaneseq
        %v430 = vshrl.u32 %v429, 7
        %v431 = vsub.s32 0, %v430
        %v432 = vrot.slane %v428, %v431
        %434 = vrot.lane.b32.xlu0 %v432, 64
        %v435 = vpop.permute.xlu0 %434
        %v437 = vadd.f32 %v421, %v435
        %v438 = vld [vmem:[#allocation2 + $0xa0] sm:$0xff]
        %v439 = vld [vmem:[#allocation2 + $0xa8] sm:$0xff]
        %v440 = vld [vmem:[#allocation2 + $0xb0] sm:$0xff]
        %v441 = vld [vmem:[#allocation2 + $0xb8] sm:$0xff]
        %v442 = vld [vmem:[#allocation2 + $0xc0] sm:$0xff]
        %v443 = vld [vmem:[#allocation2 + $0xc8] sm:$0xff]
        %v444 = vld [vmem:[#allocation2 + $0xd0] sm:$0xff]
        %v445 = vld [vmem:[#allocation2 + $0xd8] sm:$0xff]
        %v446 = vld [vmem:[#allocation2 + $0xe0] sm:$0x1]
        %v447 = vlaneseq
        %v448 = vshrl.u32 %v447, 7
        %v449 = vsub.s32 0, %v448
        %v450 = vrot.slane %v446, %v449
        %v452 = vsel %vm219, %v437, 0
        %454 = vmatprep.subr.mxu0 0.0
        %455 = vmatpush1.msra.mxu0 0.0
        %456 = vmatprep.subr.mxu0 0.0
        %457 = vmatpush1.msra.mxu0 0.0
        %458 = vmatprep.subr.mxu0 0.0
        %459 = vmatpush1.msra.mxu0 0.0
        %460 = vmatprep.subr.mxu0 0.0
        %461 = vmatpush1.msra.mxu0 0.0
        %462 = vmatprep.subr.mxu0 0.0
        %463 = vmatpush1.msra.mxu0 0.0
        %464 = vmatprep.subr.mxu0 0.0
        %465 = vmatpush1.msra.mxu0 0.0
        %466 = vmatprep.subr.mxu0 0.0
        %467 = vmatpush1.msra.mxu0 0.0
        %468 = vmatprep.subr.mxu0 0.0
        %469 = vmatpush1.msra.mxu0 0.0
        %470 = vmatprep.subr.mxu0 0.0
        %471 = vmatpush1.msra.mxu0 %v445
        %472 = vmatprep.subr.mxu0 0.0
        %473 = vmatpush1.msra.mxu0 %v444
        %474 = vmatprep.subr.mxu0 0.0
        %475 = vmatpush1.msra.mxu0 %v443
        %476 = vmatprep.subr.mxu0 0.0
        %477 = vmatpush1.msra.mxu0 %v442
        %478 = vmatprep.subr.mxu0 0.0
        %479 = vmatpush1.msra.mxu0 %v441
        %480 = vmatprep.subr.mxu0 0.0
        %481 = vmatpush1.msra.mxu0 %v440
        %482 = vmatprep.subr.mxu0 0.0
        %483 = vmatpush1.msra.mxu0 %v439
        %484 = vmatprep.subr.mxu0 0.0
        %485 = vmatpush1.msra.mxu0 %v438
        %486 = vmatprep.subr.mxu0 0.0
        %487 = vmatpush2.msra.mxu0 0.0
        %488 = vmatprep.subr.mxu0 0.0
        %489 = vmatpush2.msra.mxu0 0.0
        %490 = vmatprep.subr.mxu0 0.0
        %491 = vmatpush2.msra.mxu0 0.0
        %492 = vmatprep.subr.mxu0 0.0
        %493 = vmatpush2.msra.mxu0 0.0
        %494 = vmatprep.subr.mxu0 0.0
        %495 = vmatpush2.msra.mxu0 0.0
        %496 = vmatprep.subr.mxu0 0.0
        %497 = vmatpush2.msra.mxu0 0.0
        %498 = vmatprep.subr.mxu0 0.0
        %499 = vmatpush2.msra.mxu0 0.0
        %500 = vmatprep.subr.mxu0 0.0
        %501 = vmatpush2.msra.mxu0 0.0
        %502 = vmatprep.subr.mxu0 0.0
        %503 = vmatpush2.msra.mxu0 0.0
        %504 = vmatprep.subr.mxu0 0.0
        %505 = vmatpush2.msra.mxu0 0.0
        %506 = vmatprep.subr.mxu0 0.0
        %507 = vmatpush2.msra.mxu0 0.0
        %508 = vmatprep.subr.mxu0 0.0
        %509 = vmatpush2.msra.mxu0 0.0
        %510 = vmatprep.subr.mxu0 0.0
        %511 = vmatpush2.msra.mxu0 0.0
        %512 = vmatprep.subr.mxu0 0.0
        %513 = vmatpush2.msra.mxu0 0.0
        %514 = vmatprep.subr.mxu0 0.0
        %515 = vmatpush2.msra.mxu0 0.0
        %516 = vmatprep.subr.mxu0 0.0
        %517 = vmatpush2.msra.mxu0 0.0
        %518 = vmatprep.mubr.f32.mxu0 0.0
        %519 = vmatmul.mubr.f32.gmra.mxu0 %v452
        %v520 = vpop.f32.mrf.mxu0
        %v521 = vadd.f32 %v450, %v520
        %v522 = vpop.f32.mrf.mxu0
        %523 = vdwg.mxu0
        %v524 = vmax.f32 %v521, 0.0
        %v525 = vld [vmem:[#allocation2 + $0xe8] sm:$0xff]
        %v526 = vld [vmem:[#allocation2 + $0xf0] sm:$0xff]
        %v527 = vld [vmem:[#allocation2 + $0xf8] sm:$0xff]
        %v528 = vld [vmem:[#allocation2 + $0x100] sm:$0xff]
        %v529 = vld [vmem:[#allocation2 + $0x108] sm:$0xff]
        %v530 = vld [vmem:[#allocation2 + $0x110] sm:$0xff]
        %v531 = vld [vmem:[#allocation2 + $0x118] sm:$0xff]
        %v532 = vld [vmem:[#allocation2 + $0x120] sm:$0xff]
        %v533 = vld [vmem:[#allocation2 + $0x128] sm:$0xff]
        %v534 = vld [vmem:[#allocation2 + $0x130] sm:$0xff]
        %v535 = vld [vmem:[#allocation2 + $0x138] sm:$0xff]
        %v536 = vld [vmem:[#allocation2 + $0x140] sm:$0xff]
        %v537 = vld [vmem:[#allocation2 + $0x148] sm:$0xff]
        %v538 = vld [vmem:[#allocation2 + $0x150] sm:$0xff]
        %v539 = vld [vmem:[#allocation2 + $0x158] sm:$0xff]
        %v540 = vld [vmem:[#allocation2 + $0x160] sm:$0xff]
        %v541 = vld [vmem:[#allocation2 + $0x168] sm:$0x1]
        %v542 = vlaneseq
        %v543 = vshrl.u32 %v542, 7
        %v544 = vsub.s32 0, %v543
        %v545 = vrot.slane %v541, %v544
        %546 = vmatprep.subr.mxu0 0.0
        %547 = vmatpush1.msra.mxu0 %v540
        %548 = vmatprep.subr.mxu0 0.0
        %549 = vmatpush1.msra.mxu0 %v539
        %550 = vmatprep.subr.mxu0 0.0
        %551 = vmatpush1.msra.mxu0 %v538
        %552 = vmatprep.subr.mxu0 0.0
        %553 = vmatpush1.msra.mxu0 %v537
        %554 = vmatprep.subr.mxu0 0.0
        %555 = vmatpush1.msra.mxu0 %v536
        %556 = vmatprep.subr.mxu0 0.0
        %557 = vmatpush1.msra.mxu0 %v535
        %558 = vmatprep.subr.mxu0 0.0
        %559 = vmatpush1.msra.mxu0 %v534
        %560 = vmatprep.subr.mxu0 0.0
        %561 = vmatpush1.msra.mxu0 %v533
        %562 = vmatprep.subr.mxu0 0.0
        %563 = vmatpush1.msra.mxu0 %v532
        %564 = vmatprep.subr.mxu0 0.0
        %565 = vmatpush1.msra.mxu0 %v531
        %566 = vmatprep.subr.mxu0 0.0
        %567 = vmatpush1.msra.mxu0 %v530
        %568 = vmatprep.subr.mxu0 0.0
        %569 = vmatpush1.msra.mxu0 %v529
        %570 = vmatprep.subr.mxu0 0.0
        %571 = vmatpush1.msra.mxu0 %v528
        %572 = vmatprep.subr.mxu0 0.0
        %573 = vmatpush1.msra.mxu0 %v527
        %574 = vmatprep.subr.mxu0 0.0
        %575 = vmatpush1.msra.mxu0 %v526
        %576 = vmatprep.subr.mxu0 0.0
        %577 = vmatpush1.msra.mxu0 %v525
        %578 = vmatprep.subr.mxu0 0.0
        %579 = vmatpush2.msra.mxu0 0.0
        %580 = vmatprep.subr.mxu0 0.0
        %581 = vmatpush2.msra.mxu0 0.0
        %582 = vmatprep.subr.mxu0 0.0
        %583 = vmatpush2.msra.mxu0 0.0
        %584 = vmatprep.subr.mxu0 0.0
        %585 = vmatpush2.msra.mxu0 0.0
        %586 = vmatprep.subr.mxu0 0.0
        %587 = vmatpush2.msra.mxu0 0.0
        %588 = vmatprep.subr.mxu0 0.0
        %589 = vmatpush2.msra.mxu0 0.0
        %590 = vmatprep.subr.mxu0 0.0
        %591 = vmatpush2.msra.mxu0 0.0
        %592 = vmatprep.subr.mxu0 0.0
        %593 = vmatpush2.msra.mxu0 0.0
        %594 = vmatprep.subr.mxu0 0.0
        %595 = vmatpush2.msra.mxu0 0.0
        %596 = vmatprep.subr.mxu0 0.0
        %597 = vmatpush2.msra.mxu0 0.0
        %598 = vmatprep.subr.mxu0 0.0
        %599 = vmatpush2.msra.mxu0 0.0
        %600 = vmatprep.subr.mxu0 0.0
        %601 = vmatpush2.msra.mxu0 0.0
        %602 = vmatprep.subr.mxu0 0.0
        %603 = vmatpush2.msra.mxu0 0.0
        %604 = vmatprep.subr.mxu0 0.0
        %605 = vmatpush2.msra.mxu0 0.0
        %606 = vmatprep.subr.mxu0 0.0
        %607 = vmatpush2.msra.mxu0 0.0
        %608 = vmatprep.subr.mxu0 0.0
        %609 = vmatpush2.msra.mxu0 0.0
        %610 = vmatprep.mubr.f32.mxu0 0.0
        %611 = vmatmul.mubr.f32.gmra.mxu0 %v524
        %v612 = vpop.f32.mrf.mxu0
        %v613 = vadd.f32 %v545, %v612
        %v614 = vpop.f32.mrf.mxu0
        %615 = vdwg.mxu0
        %v616 = vmax.f32 %v613, 0.0
        %617 = vst.msk [vmem:[%s189] sm:$0xff] %vm219, %v616
        %s618 = sand.u32 %s99, 1
        %s619 = scalar_lea.sflag [#allocation4], %s618
        %s620 = sand.u32 %s99, 1
        %s621 = smul.addr %s620, 8
        %s622 = scalar_lea.vmem [#allocation5], %s621
        // Predicated region
        $region37: #{tpu_custom_call.1} parent=31 // pred_check
          %p623 = pneg %p109
        $region38: #{tpu_custom_call.1} parent=31 // pred_check_branch
          %625 = sbr.rel (%p623) target = $region40
        $region39: #{tpu_custom_call.1} parent=31 // pred_region
          %s627 = ssub.s32 128, 128
          %628 = vsyncadd %s619, %s627
          %s629 = smul.addr %s18, 128
          %s630 = scalar_lea.hbm %s3, %s629
          %s632 = sshll.u32 %s622, 4
          %s633 = int_to_ptr.vmem [resolvable:$true] %s632
          %635 = dma.vmem_to_hbm [thread:$0]  %s633, 128, %s630, %s619
        $region40: #{tpu_custom_call.1} parent=31 // pred_fallthru
          _
      $region32: #{tpu_custom_call.1} parent=5 // pred_fallthru
        _
      %p636 = scmp.le.s32.totalorder 2, %s13
      // Predicated region
      $region41: #{tpu_custom_call.1} parent=5 // pred_check
        %p637 = pneg %p636
      $region42: #{tpu_custom_call.1} parent=5 // pred_check_branch
        %639 = sbr.rel (%p637) target = $region44
      $region43: #{tpu_custom_call.1} parent=5 // pred_region
        %s640 = ssub.s32 %s13, 2
        // Predicated region
        $region45: #{tpu_custom_call.1} parent=43 // pred_check
          %p641 = pneg %p115
        $region46: #{tpu_custom_call.1} parent=43 // pred_check_branch
          %643 = sbr.rel (%p641) target = $region48
        $region47: #{tpu_custom_call.1} parent=43 // pred_region
          %s644 = sand.u32 %s100, 1
          %s645 = scalar_lea.sflag [#allocation4], %s644
          %s646 = sand.u32 %s100, 1
          %s647 = smul.addr %s646, 8
          %s648 = scalar_lea.vmem [#allocation5], %s647
          %649 = dma.done %s645, 128
        $region48: #{tpu_custom_call.1} parent=43 // pred_fallthru
          _
      $region44: #{tpu_custom_call.1} parent=5 // pred_fallthru
        _
    $region6: #{tpu_custom_call.1} parent=1 // loop_footer
      %s17 = sadd.s32 1, %s13
    $region7: #{tpu_custom_call.1} parent=1 // loop_footer_branch
      %12 = sbr.rel target = $region3
    $region8: #{tpu_custom_call.1} parent=1 // loop_exit
      _
    %650 = vsyncpa [#allocation3], 1
    %s651 = scalar_lea.sflag [#allocation3], 1
    %652 = vsyncpa %s651, 1
    %653 = vsyncpa [#allocation4], 1
    %s654 = scalar_lea.sflag [#allocation4], 1
    %655 = vsyncpa %s654, 1

</llo_original>
